<compile_context>
chip_gen: v7x
topology: tpu7x:2x2x1
jax: 0.10.0
libtpu: 0.0.40
codegen_flags: <defaults>
</compile_context>

<pallas_src>
import functools

import jax
import jax.numpy as jnp
from jax.experimental import pallas as pl
from jax.experimental.pallas import tpu as pltpu

LANE = 128


def _round_up(x, m):
    return ((x + m - 1) // m) * m


def _is_v5e():
    """Best-effort detection of TPU v5e (128x128 MXU -> split-K form is preferable)."""
    try:
        kind = jax.devices()[0].device_kind.lower()
    except Exception:
        return False
    return ("v5e" in kind) or ("v5 lite" in kind) or ("v5litepod" in kind)


def _sage_fused_kernel(adj_ref, x_ref, *rest, num_layers, f_pad, split_k):
    """Fused forward of all SAGEConv layers for one graph (one grid step).

    adj_ref: (N, N)     bf16, row-normalized adjacency (adj / deg folded in)
    x_ref:   (N, Fp)    f32, zero-padded node features
    rest:    per layer (w_ref, b_ref), then out_ref
             w_ref: (2*Fp, Fp) bf16 = [Wl^T ; Wr^T] zero-padded
             b_ref: (1, Fp)    f32  zero-padded bias (lin_l bias)
    """
    out_ref = rest[-1]
    adj = adj_ref[...]          # mean aggregation matrix, bf16
    h = x_ref[...]              # f32 activations; padded lanes stay exactly zero

    for layer in range(num_layers):
        w_ref = rest[2 * layer]
        b = rest[2 * layer + 1][...]
        h_bf = h.astype(jnp.bfloat16)

        # mean neighbor aggregation: adj_norm @ h   (MXU, f32 accumulation)
        agg = jnp.dot(adj, h_bf, preferred_element_type=jnp.float32)
        agg_bf = agg.astype(jnp.bfloat16)

        if split_k:
            # v5e: two K=Fp pushes from static halves of the packed weight,
            # no lane-axis concat.
            h = (jnp.dot(agg_bf, w_ref[:f_pad, :], preferred_element_type=jnp.float32)
                 + jnp.dot(h_bf, w_ref[f_pad:, :], preferred_element_type=jnp.float32)
                 + b)
        else:
            # v6e/v7x: single K=2*Fp push exactly fills the 256-deep MXU.
            cat = jnp.concatenate([agg_bf, h_bf], axis=-1)
            h = jnp.dot(cat, w_ref[...], preferred_element_type=jnp.float32) + b

        if layer < num_layers - 1:
            h = jnp.maximum(h, 0.0)  # ReLU on non-final layers
        # TODO(synk): F.dropout is identity in eval mode (training=False); omitted.

    out_ref[...] = h.astype(out_ref.dtype)


def preprocess_adjacency(adj):
    """One-time prologue: fold 1/deg into the adjacency (f32 math, one bf16 cast)."""
    deg = jnp.maximum(jnp.sum(adj, axis=-1, keepdims=True), 1.0)
    return (adj / deg).astype(jnp.bfloat16)


def pack_sage_params(params):
    """One-time packing: per layer W = [Wl^T ; Wr^T], zero-padded to lane multiples, bf16."""
    dims = [params[0][0].shape[1]] + [w_l.shape[0] for (w_l, _, _) in params]
    f_pad = _round_up(max(dims), LANE)
    packed = []
    for (w_l, w_r, b) in params:
        f_out, f_in = w_l.shape
        w = jnp.zeros((2 * f_pad, f_pad), jnp.float32)
        w = w.at[:f_in, :f_out].set(w_l.T)
        w = w.at[f_pad:f_pad + f_in, :f_out].set(w_r.T)
        b_pad = jnp.zeros((1, f_pad), jnp.float32).at[0, :f_out].set(b)
        packed.append((w.astype(jnp.bfloat16), b_pad))
    return packed, f_pad


def sage_variant_forward(x, adj_norm, packed_params, out_channels, split_k=None):
    """Forward pass of SAGE_Variant (inference mode), one fused pallas_call.

    Accepts a single graph (x: (N, F), adj_norm: (N, N)) or a batch of graphs
    (x: (G, N, F), adj_norm: (G, N, N)); batches run as a parallel grid axis.
    """
    if split_k is None:
        split_k = _is_v5e()

    single = (x.ndim == 2)
    if single:
        x = x[None]
        adj_norm = adj_norm[None]

    g, n, f_in = x.shape
    f_pad = packed_params[0][0].shape[1]
    num_layers = len(packed_params)

    x_pad = jnp.pad(x.astype(jnp.float32), ((0, 0), (0, 0), (0, f_pad - f_in)))

    flat_inputs = [adj_norm, x_pad]
    in_specs = [
        pl.BlockSpec((None, n, n), lambda gi: (gi, 0, 0)),
        pl.BlockSpec((None, n, f_pad), lambda gi: (gi, 0, 0)),
    ]
    for (w, b) in packed_params:
        flat_inputs += [w, b]
        in_specs += [
            pl.BlockSpec((2 * f_pad, f_pad), lambda gi: (0, 0)),  # resident across graphs
            pl.BlockSpec((1, f_pad), lambda gi: (0, 0)),
        ]

    kernel = functools.partial(
        _sage_fused_kernel, num_layers=num_layers, f_pad=f_pad, split_k=split_k)

    out = pl.pallas_call(
        kernel,
        grid=(g,),
        out_shape=jax.ShapeDtypeStruct((g, n, f_pad), jnp.bfloat16),
        in_specs=in_specs,
        out_specs=pl.BlockSpec((None, n, f_pad), lambda gi: (gi, 0, 0)),
        compiler_params=pltpu.CompilerParams(dimension_semantics=("parallel",)),
    )(*flat_inputs)

    out = out[..., :out_channels].astype(jnp.float32)
    return out[0] if single else out


def init_sage_params(key, in_channels, hidden_channels, out_channels, num_layers):
    """Deterministic Glorot-style init matching SAGEConv parameter shapes."""
    dims = []
    if num_layers == 1:
        dims.append((in_channels, out_channels))
    else:
        dims.append((in_channels, hidden_channels))
        for _ in range(num_layers - 2):
            dims.append((hidden_channels, hidden_channels))
        dims.append((hidden_channels, out_channels))

    params = []
    for (fin, fout) in dims:
        key, k1, k2, k3 = jax.random.split(key, 4)
        scale = 1.0 / jnp.sqrt(jnp.float32(fin))
        w_l = jax.random.uniform(k1, (fout, fin), jnp.float32, -scale, scale)
        w_r = jax.random.uniform(k2, (fout, fin), jnp.float32, -scale, scale)
        b = jax.random.uniform(k3, (fout,), jnp.float32, -scale, scale)
        params.append((w_l, w_r, b))
    return params


if __name__ == "__main__":
    # Small shapes consistent with the module: G graphs, N nodes, in/hidden/out features.
    G = 2
    N = 16
    in_channels = 8
    hidden_channels = 32
    out_channels = 16
    num_layers = 2
    dropout = 0.5  # identity at inference

    key = jax.random.PRNGKey(0)
    key, kx, ka, kp = jax.random.split(key, 4)

    x = jax.random.normal(kx, (G, N, in_channels), jnp.float32)

    # Random symmetric binary adjacencies without self loops (one per graph).
    a = (jax.random.uniform(ka, (G, N, N)) < 0.3).astype(jnp.float32)
    eye = jnp.eye(N, dtype=jnp.float32)[None]
    adj = jnp.maximum(a, jnp.swapaxes(a, -1, -2)) * (1.0 - eye)

    params = init_sage_params(kp, in_channels, hidden_channels, out_channels, num_layers)

    # One-time preprocessing (hoisted out of the per-forward path).
    adj_norm = preprocess_adjacency(adj)
    packed_params, _ = pack_sage_params(params)

    out = sage_variant_forward(x, adj_norm, packed_params, out_channels)
    jax.block_until_ready(out)

    # Pure-JAX f32 reference. bf16 MXU inputs (f32 accumulation) + bf16 1/deg fold
    # + bf16 output store -> relaxed tolerance.
    def ref_layer(h, adj_f32, w_l, w_r, b, relu):
        deg = jnp.maximum(adj_f32.sum(-1, keepdims=True), 1.0)
        agg = (adj_f32 @ h) / deg
        o = agg @ w_l.T + h @ w_r.T + b
        return jnp.maximum(o, 0.0) if relu else o

    ref = x
    for (w_l, w_r, b) in params[:-1]:
        ref = ref_layer(ref, adj, w_l, w_r, b, True)
    w_l, w_r, b = params[-1]
    ref = ref_layer(ref, adj, w_l, w_r, b, False)

    assert out.shape == (G, N, out_channels)
    assert jnp.allclose(out, ref, atol=5e-2, rtol=5e-2), float(jnp.max(jnp.abs(out - ref)))

    print("KERNEL_OK")
</pallas_src>

<mosaic_0001>
module attributes {stable_mosaic.version = 11 : i64} {
  func.func @_sage_fused_kernel(%arg0: i32, %arg1: memref<1x16x16xbf16, #tpu.memory_space<vmem>>, %arg2: memref<1x16x128xf32, #tpu.memory_space<vmem>>, %arg3: memref<256x128xbf16, #tpu.memory_space<vmem>>, %arg4: memref<1x128xf32, #tpu.memory_space<vmem>>, %arg5: memref<256x128xbf16, #tpu.memory_space<vmem>>, %arg6: memref<1x128xf32, #tpu.memory_space<vmem>>, %arg7: memref<1x16x128xbf16, #tpu.memory_space<vmem>>) attributes {dimension_semantics = [#tpu.dimension_semantics<parallel>], iteration_bounds = array<i64: 2>, scalar_prefetch = 0 : i64, scratch_operands = 0 : i64, tpu.core_type = #tpu.core_type<tc>, window_params = [{transform_indices = @transform_0, window_bounds = array<i64: 1, 16, 16>}, {transform_indices = @transform_1, window_bounds = array<i64: 1, 16, 128>}, {pipeline_mode = #tpu.pipeline_mode<synchronous>, transform_indices = @transform_2, window_bounds = array<i64: 256, 128>}, {pipeline_mode = #tpu.pipeline_mode<synchronous>, transform_indices = @transform_3, window_bounds = array<i64: 1, 128>}, {pipeline_mode = #tpu.pipeline_mode<synchronous>, transform_indices = @transform_4, window_bounds = array<i64: 256, 128>}, {pipeline_mode = #tpu.pipeline_mode<synchronous>, transform_indices = @transform_5, window_bounds = array<i64: 1, 128>}, {transform_indices = @transform_6, window_bounds = array<i64: 1, 16, 128>}]} {
    %c0 = arith.constant 0 : index
    %c0_0 = arith.constant 0 : index
    %c0_1 = arith.constant 0 : index
    %0 = vector.load %arg1[%c0, %c0_0, %c0_1] : memref<1x16x16xbf16, #tpu.memory_space<vmem>>, vector<1x16x16xbf16>
    %1 = vector.shape_cast %0 : vector<1x16x16xbf16> to vector<16x16xbf16>
    %c0_2 = arith.constant 0 : index
    %c0_3 = arith.constant 0 : index
    %c0_4 = arith.constant 0 : index
    %2 = vector.load %arg2[%c0_2, %c0_3, %c0_4] : memref<1x16x128xf32, #tpu.memory_space<vmem>>, vector<1x16x128xf32>
    %3 = vector.shape_cast %2 : vector<1x16x128xf32> to vector<16x128xf32>
    %c0_5 = arith.constant 0 : index
    %c0_6 = arith.constant 0 : index
    %4 = vector.load %arg4[%c0_5, %c0_6] : memref<1x128xf32, #tpu.memory_space<vmem>>, vector<1x128xf32>
    %5 = arith.truncf %3 : vector<16x128xf32> to vector<16x128xbf16>
    %cst = arith.constant dense<0.000000e+00> : vector<16x128xf32>
    %6 = tpu.matmul %1, %5, %cst {dimension_numbers = #tpu.dot_dimension_numbers<[1], [0], [0], [1], [0, 0, 1, 1], [], []>} : vector<16x16xbf16>, vector<16x128xbf16>, vector<16x128xf32> -> vector<16x128xf32>
    %7 = arith.truncf %6 : vector<16x128xf32> to vector<16x128xbf16>
    %8 = tpu.concatenate %7, %5 in 1 : vector<16x128xbf16>, vector<16x128xbf16> -> vector<16x256xbf16>
    %c0_7 = arith.constant 0 : index
    %c0_8 = arith.constant 0 : index
    %9 = vector.load %arg3[%c0_7, %c0_8] : memref<256x128xbf16, #tpu.memory_space<vmem>>, vector<256x128xbf16>
    %cst_9 = arith.constant dense<0.000000e+00> : vector<16x128xf32>
    %10 = tpu.matmul %8, %9, %cst_9 {dimension_numbers = #tpu.dot_dimension_numbers<[1], [0], [0], [1], [0, 0, 1, 1], [], []>} : vector<16x256xbf16>, vector<256x128xbf16>, vector<16x128xf32> -> vector<16x128xf32>
    %11 = vector.broadcast %4 : vector<1x128xf32> to vector<16x128xf32>
    %12 = arith.addf %10, %11 : vector<16x128xf32>
    %cst_10 = arith.constant 0.000000e+00 : f32
    %13 = vector.broadcast %cst_10 : f32 to vector<16x128xf32>
    %14 = arith.maximumf %12, %13 : vector<16x128xf32>
    %c0_11 = arith.constant 0 : index
    %c0_12 = arith.constant 0 : index
    %15 = vector.load %arg6[%c0_11, %c0_12] : memref<1x128xf32, #tpu.memory_space<vmem>>, vector<1x128xf32>
    %16 = arith.truncf %14 : vector<16x128xf32> to vector<16x128xbf16>
    %cst_13 = arith.constant dense<0.000000e+00> : vector<16x128xf32>
    %17 = tpu.matmul %1, %16, %cst_13 {dimension_numbers = #tpu.dot_dimension_numbers<[1], [0], [0], [1], [0, 0, 1, 1], [], []>} : vector<16x16xbf16>, vector<16x128xbf16>, vector<16x128xf32> -> vector<16x128xf32>
    %18 = arith.truncf %17 : vector<16x128xf32> to vector<16x128xbf16>
    %19 = tpu.concatenate %18, %16 in 1 : vector<16x128xbf16>, vector<16x128xbf16> -> vector<16x256xbf16>
    %c0_14 = arith.constant 0 : index
    %c0_15 = arith.constant 0 : index
    %20 = vector.load %arg5[%c0_14, %c0_15] : memref<256x128xbf16, #tpu.memory_space<vmem>>, vector<256x128xbf16>
    %cst_16 = arith.constant dense<0.000000e+00> : vector<16x128xf32>
    %21 = tpu.matmul %19, %20, %cst_16 {dimension_numbers = #tpu.dot_dimension_numbers<[1], [0], [0], [1], [0, 0, 1, 1], [], []>} : vector<16x256xbf16>, vector<256x128xbf16>, vector<16x128xf32> -> vector<16x128xf32>
    %22 = vector.broadcast %15 : vector<1x128xf32> to vector<16x128xf32>
    %23 = arith.addf %21, %22 : vector<16x128xf32>
    %24 = arith.truncf %23 : vector<16x128xf32> to vector<16x128xbf16>
    %c0_17 = arith.constant 0 : index
    %c0_18 = arith.constant 0 : index
    %c0_19 = arith.constant 0 : index
    %25 = vector.load %arg7[%c0_17, %c0_18, %c0_19] : memref<1x16x128xbf16, #tpu.memory_space<vmem>>, vector<1x16x128xbf16>
    %26 = vector.shape_cast %25 : vector<1x16x128xbf16> to vector<16x128xbf16>
    %27 = vector.shape_cast %24 : vector<16x128xbf16> to vector<1x16x128xbf16>
    tpu.vector_store %arg7[%c0_17, %c0_18, %c0_19], %27 {strides = array<i32>} : memref<1x16x128xbf16, #tpu.memory_space<vmem>>, vector<1x16x128xbf16>,
    return
  }
  func.func @transform_0(%arg0: i32) -> (i32, i32, i32) {
    %c0_i32 = arith.constant 0 : i32
    %c0_i32_0 = arith.constant 0 : i32
    %c0_i32_1 = arith.constant 0 : i32
    return %arg0, %c0_i32, %c0_i32_0 : i32, i32, i32
  }
  func.func @transform_1(%arg0: i32) -> (i32, i32, i32) {
    %c0_i32 = arith.constant 0 : i32
    %c0_i32_0 = arith.constant 0 : i32
    %c0_i32_1 = arith.constant 0 : i32
    return %arg0, %c0_i32, %c0_i32_0 : i32, i32, i32
  }
  func.func @transform_2(%arg0: i32) -> (i32, i32) {
    %c0_i32 = arith.constant 0 : i32
    %c0_i32_0 = arith.constant 0 : i32
    %c0_i32_1 = arith.constant 0 : i32
    return %c0_i32, %c0_i32_0 : i32, i32
  }
  func.func @transform_3(%arg0: i32) -> (i32, i32) {
    %c0_i32 = arith.constant 0 : i32
    %c0_i32_0 = arith.constant 0 : i32
    %c0_i32_1 = arith.constant 0 : i32
    return %c0_i32, %c0_i32_0 : i32, i32
  }
  func.func @transform_4(%arg0: i32) -> (i32, i32) {
    %c0_i32 = arith.constant 0 : i32
    %c0_i32_0 = arith.constant 0 : i32
    %c0_i32_1 = arith.constant 0 : i32
    return %c0_i32, %c0_i32_0 : i32, i32
  }
  func.func @transform_5(%arg0: i32) -> (i32, i32) {
    %c0_i32 = arith.constant 0 : i32
    %c0_i32_0 = arith.constant 0 : i32
    %c0_i32_1 = arith.constant 0 : i32
    return %c0_i32, %c0_i32_0 : i32, i32
  }
  func.func @transform_6(%arg0: i32) -> (i32, i32, i32) {
    %c0_i32 = arith.constant 0 : i32
    %c0_i32_0 = arith.constant 0 : i32
    %c0_i32_1 = arith.constant 0 : i32
    return %arg0, %c0_i32, %c0_i32_0 : i32, i32, i32
  }
}

</mosaic_0001>

<llo_original>
// kernel: tpu_custom_call.1
$region0: #{tpu_custom_call.1}
  #allocation0 [shape = 'u32[]', space=smem, size = 0x4, offset = 0x4, fixed_abs, tag = 'smem constant byte address 0x4 - core index']
  #allocation1 [shape = 'u32[144,128]{1,0:T(1,128)}', space=vmem, size = 0x12000, scoped, tag = 'internal scratch']
  %s0 = inlined_call_operand.hbm [shape: bf16[2,16,16], index: 0, kind: input, shape index: {}]
  %s1 = inlined_call_operand.hbm [shape: f32[2,16,128], index: 1, kind: input, shape index: {}]
  %s2 = inlined_call_operand.hbm [shape: bf16[256,128], index: 2, kind: input, shape index: {}]
  %s3 = inlined_call_operand.vmem [shape: f32[1,128], index: 3, kind: input, shape index: {}]
  %s4 = inlined_call_operand.hbm [shape: bf16[256,128], index: 4, kind: input, shape index: {}]
  %s5 = inlined_call_operand.vmem [shape: f32[1,128], index: 5, kind: input, shape index: {}]
  %s6 = inlined_call_operand.hbm [shape: bf16[2,16,128], index: 6, kind: output, shape index: {}]
  %s7 = sld [smem:[#allocation0]]
  $region73: #{tpu_custom_call.1} parent=0
    _
  %s9 = ssub.s32 1, %s7
  %s10 = scalar_select 0, %s9, %s7
  $region1: #{tpu_custom_call.1} parent=0
    #allocation2 [shape = 'u8[8192]{0}', space=vmem, size = 0x2000, scoped, tag = 'input window, operand 0']
    #allocation3 [shape = 's32[2]{0}', space=sflag, size = 0x8, scoped, tag = 'scoped memory for tpu_custom_call.1']
    #allocation4 [shape = 's32[2]{0}', space=sflag, size = 0x8, scoped, tag = 'scoped memory for tpu_custom_call.1']
    #allocation5 [shape = 'u8[16384]{0}', space=vmem, size = 0x4000, scoped, tag = 'input window, operand 1']
    #allocation6 [shape = 's32[2]{0}', space=sflag, size = 0x8, scoped, tag = 'scoped memory for tpu_custom_call.1']
    #allocation7 [shape = 'u8[65536]{0}', space=vmem, size = 0x10000, scoped, tag = 'input window, operand 2, single buffered']
    #allocation8 [shape = 'u8[65536]{0}', space=vmem, size = 0x10000, scoped, tag = 'input window, operand 4, single buffered']
    #allocation9 [shape = 's32[1]{0}', space=sflag, size = 0x4, scoped, tag = 'scoped memory for tpu_custom_call.1']
    #allocation10 [shape = 'u8[8192]{0}', space=vmem, size = 0x2000, scoped, tag = 'output window, operand 0']
    %11 = vsyncpa [#allocation3], 0
    %s12 = scalar_lea.sflag [#allocation3], 1
    %13 = vsyncpa %s12, 0
    %14 = vsyncpa [#allocation6], 0
    %s15 = scalar_lea.sflag [#allocation6], 1
    %16 = vsyncpa %s15, 0
    %17 = vsyncpa [#allocation9], 0
    %18 = vsyncpa [#allocation4], 0
    %s19 = scalar_lea.sflag [#allocation4], 1
    %20 = vsyncpa %s19, 0
    loop: start=0, step=1, limit=4
    $region2: #{tpu_custom_call.1} parent=1 // loop_pre_header
      _
    $region3: #{tpu_custom_call.1} parent=1 // loop_header
      %s22 = sphi 0, %s26
      %p23 = scmp.ge.s32.totalorder %s22, 4
      %s32 = sphi 0, %s34
      %s35 = sphi 0, %s32
      %s36 = sphi 0, %s35
      %s52 = sphi 0, %s36
      %s58 = sphi 0, %s60
      %s61 = sphi 0, %s58
      %s62 = sphi 0, %s61
      %s78 = sphi 0, %s62
      %s82 = sphi 0, %s82
      %s84 = sphi 0, %s82
      %s85 = sphi 0, %s84
      %s99 = sphi 0, %s85
      %s103 = sphi 0, %s103
      %s105 = sphi 0, %s103
      %s106 = sphi 0, %s105
      %s120 = sphi 0, %s106
      %s124 = sphi 0, %s124
      %s126 = sphi 0, %s124
      %s127 = sphi 0, %s126
      %s141 = sphi 0, %s127
      %s145 = sphi 0, %s145
      %s147 = sphi 0, %s145
      %s148 = sphi 0, %s147
      %s162 = sphi 0, %s148
      %s168 = sphi 0, %s170
      %s171 = sphi 0, %s168
      %s172 = sphi 0, %s171
      %s188 = sphi 0, %s172
    $region4: #{tpu_custom_call.1} parent=1 // loop_header_branch
      %25 = sbr.rel (%p23) target = $region8
    $region5: #{tpu_custom_call.1} parent=1 // loop_body
      %s27 = ssub.s32 %s22, 1
      %s28 = ssub.s32 %s22, 2
      %s29 = sadd.s32 %s22, 1
      %s30 = ssub.s32 %s22, %s29
      %p31 = scmp.eq.s32.totalorder %s30, 0
      %s33 = sadd.s32 %s32, 1
      %s34 = scalar_select %p31, %s32, %s33
      %p37 = pneg %p31
      %p38 = scmp.eq.s32.totalorder %s22, 1
      %p39 = por %p37, %p38
      %p40 = scmp.ne.s32.totalorder %s32, %s35
      %p41 = scmp.eq.s32.totalorder %s22, 0
      %p42 = por %p40, %p41
      %p43 = scmp.ne.s32.totalorder %s32, %s35
      %p44 = scmp.eq.s32.totalorder %s27, 1
      %p45 = por %p43, %p44
      %p46 = scmp.ne.s32.totalorder %s35, %s36
      %p47 = scmp.eq.s32.totalorder %s27, 0
      %p48 = por %p46, %p47
      %p49 = scmp.ne.s32.totalorder %s35, %s36
      %p50 = scmp.eq.s32.totalorder %s28, 1
      %p51 = por %p49, %p50
      %p53 = scmp.ne.s32.totalorder %s36, %s52
      %p54 = scmp.eq.s32.totalorder %s28, 0
      %p55 = por %p53, %p54
      %s56 = ssub.s32 %s22, %s29
      %p57 = scmp.eq.s32.totalorder %s56, 0
      %s59 = sadd.s32 %s58, 1
      %s60 = scalar_select %p57, %s58, %s59
      %p63 = pneg %p57
      %p64 = scmp.eq.s32.totalorder %s22, 1
      %p65 = por %p63, %p64
      %p66 = scmp.ne.s32.totalorder %s58, %s61
      %p67 = scmp.eq.s32.totalorder %s22, 0
      %p68 = por %p66, %p67
      %p69 = scmp.ne.s32.totalorder %s58, %s61
      %p70 = scmp.eq.s32.totalorder %s27, 1
      %p71 = por %p69, %p70
      %p72 = scmp.ne.s32.totalorder %s61, %s62
      %p73 = scmp.eq.s32.totalorder %s27, 0
      %p74 = por %p72, %p73
      %p75 = scmp.ne.s32.totalorder %s61, %s62
      %p76 = scmp.eq.s32.totalorder %s28, 1
      %p77 = por %p75, %p76
      %p79 = scmp.ne.s32.totalorder %s62, %s78
      %p80 = scmp.eq.s32.totalorder %s28, 0
      %p81 = por %p79, %p80
      %s83 = sadd.s32 %s82, 1
      %p86 = scmp.eq.s32.totalorder %s22, 1
      %p87 = scmp.ne.s32.totalorder %s82, %s84
      %p88 = scmp.eq.s32.totalorder %s22, 0
      %p89 = por %p87, %p88
      %p90 = scmp.ne.s32.totalorder %s82, %s84
      %p91 = scmp.eq.s32.totalorder %s27, 1
      %p92 = por %p90, %p91
      %p93 = scmp.ne.s32.totalorder %s84, %s85
      %p94 = scmp.eq.s32.totalorder %s27, 0
      %p95 = por %p93, %p94
      %p96 = scmp.ne.s32.totalorder %s84, %s85
      %p97 = scmp.eq.s32.totalorder %s28, 1
      %p98 = por %p96, %p97
      %p100 = scmp.ne.s32.totalorder %s85, %s99
      %p101 = scmp.eq.s32.totalorder %s28, 0
      %p102 = por %p100, %p101
      %s104 = sadd.s32 %s103, 1
      %p107 = scmp.eq.s32.totalorder %s22, 1
      %p108 = scmp.ne.s32.totalorder %s103, %s105
      %p109 = scmp.eq.s32.totalorder %s22, 0
      %p110 = por %p108, %p109
      %p111 = scmp.ne.s32.totalorder %s103, %s105
      %p112 = scmp.eq.s32.totalorder %s27, 1
      %p113 = por %p111, %p112
      %p114 = scmp.ne.s32.totalorder %s105, %s106
      %p115 = scmp.eq.s32.totalorder %s27, 0
      %p116 = por %p114, %p115
      %p117 = scmp.ne.s32.totalorder %s105, %s106
      %p118 = scmp.eq.s32.totalorder %s28, 1
      %p119 = por %p117, %p118
      %p121 = scmp.ne.s32.totalorder %s106, %s120
      %p122 = scmp.eq.s32.totalorder %s28, 0
      %p123 = por %p121, %p122
      %s125 = sadd.s32 %s124, 1
      %p128 = scmp.eq.s32.totalorder %s22, 1
      %p129 = scmp.ne.s32.totalorder %s124, %s126
      %p130 = scmp.eq.s32.totalorder %s22, 0
      %p131 = por %p129, %p130
      %p132 = scmp.ne.s32.totalorder %s124, %s126
      %p133 = scmp.eq.s32.totalorder %s27, 1
      %p134 = por %p132, %p133
      %p135 = scmp.ne.s32.totalorder %s126, %s127
      %p136 = scmp.eq.s32.totalorder %s27, 0
      %p137 = por %p135, %p136
      %p138 = scmp.ne.s32.totalorder %s126, %s127
      %p139 = scmp.eq.s32.totalorder %s28, 1
      %p140 = por %p138, %p139
      %p142 = scmp.ne.s32.totalorder %s127, %s141
      %p143 = scmp.eq.s32.totalorder %s28, 0
      %p144 = por %p142, %p143
      %s146 = sadd.s32 %s145, 1
      %p149 = scmp.eq.s32.totalorder %s22, 1
      %p150 = scmp.ne.s32.totalorder %s145, %s147
      %p151 = scmp.eq.s32.totalorder %s22, 0
      %p152 = por %p150, %p151
      %p153 = scmp.ne.s32.totalorder %s145, %s147
      %p154 = scmp.eq.s32.totalorder %s27, 1
      %p155 = por %p153, %p154
      %p156 = scmp.ne.s32.totalorder %s147, %s148
      %p157 = scmp.eq.s32.totalorder %s27, 0
      %p158 = por %p156, %p157
      %p159 = scmp.ne.s32.totalorder %s147, %s148
      %p160 = scmp.eq.s32.totalorder %s28, 1
      %p161 = por %p159, %p160
      %p163 = scmp.ne.s32.totalorder %s148, %s162
      %p164 = scmp.eq.s32.totalorder %s28, 0
      %p165 = por %p163, %p164
      %s166 = ssub.s32 %s22, %s29
      %p167 = scmp.eq.s32.totalorder %s166, 0
      %s169 = sadd.s32 %s168, 1
      %s170 = scalar_select %p167, %s168, %s169
      %p173 = pneg %p167
      %p174 = scmp.eq.s32.totalorder %s22, 1
      %p175 = por %p173, %p174
      %p176 = scmp.ne.s32.totalorder %s168, %s171
      %p177 = scmp.eq.s32.totalorder %s22, 0
      %p178 = por %p176, %p177
      %p179 = scmp.ne.s32.totalorder %s168, %s171
      %p180 = scmp.eq.s32.totalorder %s27, 1
      %p181 = por %p179, %p180
      %p182 = scmp.ne.s32.totalorder %s171, %s172
      %p183 = scmp.eq.s32.totalorder %s27, 0
      %p184 = por %p182, %p183
      %p185 = scmp.ne.s32.totalorder %s171, %s172
      %p186 = scmp.eq.s32.totalorder %s28, 1
      %p187 = por %p185, %p186
      %p189 = scmp.ne.s32.totalorder %s172, %s188
      %p190 = scmp.eq.s32.totalorder %s28, 0
      %p191 = por %p189, %p190
      %p192 = scmp.le.s32.totalorder 1, %s22
      %p193 = scmp.lt.s32.totalorder %s22, 3
      %p194 = pnand %p192, %p193
      %p195 = pneg %p194
      // Predicated region
      $region9: #{tpu_custom_call.1} parent=5 // pred_check
        _
      $region10: #{tpu_custom_call.1} parent=5 // pred_check_branch
        %197 = sbr.rel (%p194) target = $region12
      $region11: #{tpu_custom_call.1} parent=5 // pred_region
        %s198 = ssub.s32 %s22, 1
        // Predicated region
        $region13: #{tpu_custom_call.1} parent=11 // pred_check
          %p199 = pneg %p95
        $region14: #{tpu_custom_call.1} parent=11 // pred_check_branch
          %201 = sbr.rel (%p199) target = $region16
        $region15: #{tpu_custom_call.1} parent=11 // pred_region
          %s203 = ssub.s32 2048, 2048
          %204 = vsyncadd [#allocation6], %s203
          %s205 = sshll.u32 [#allocation7], 4
          %s206 = int_to_ptr.vmem [resolvable:$true] %s205
          %211 = dma.hbm_to_vmem [thread:$0]  %s2, 2048, %s206, [#allocation6], 64, 64, 4
        $region16: #{tpu_custom_call.1} parent=11 // pred_fallthru
          _
        // Predicated region
        $region17: #{tpu_custom_call.1} parent=11 // pred_check
          %p212 = pneg %p116
        $region18: #{tpu_custom_call.1} parent=11 // pred_check_branch
          %214 = sbr.rel (%p212) target = $region20
        $region19: #{tpu_custom_call.1} parent=11 // pred_region
          _
        $region20: #{tpu_custom_call.1} parent=11 // pred_fallthru
          _
        // Predicated region
        $region21: #{tpu_custom_call.1} parent=11 // pred_check
          %p215 = pneg %p137
        $region22: #{tpu_custom_call.1} parent=11 // pred_check_branch
          %217 = sbr.rel (%p215) target = $region24
        $region23: #{tpu_custom_call.1} parent=11 // pred_region
          %s219 = ssub.s32 2048, 2048
          %220 = vsyncadd [#allocation9], %s219
          %s221 = sshll.u32 [#allocation8], 4
          %s222 = int_to_ptr.vmem [resolvable:$true] %s221
          %227 = dma.hbm_to_vmem [thread:$0]  %s4, 2048, %s222, [#allocation9], 64, 64, 4
        $region24: #{tpu_custom_call.1} parent=11 // pred_fallthru
          _
        // Predicated region
        $region25: #{tpu_custom_call.1} parent=11 // pred_check
          %p228 = pneg %p158
        $region26: #{tpu_custom_call.1} parent=11 // pred_check_branch
          %230 = sbr.rel (%p228) target = $region28
        $region27: #{tpu_custom_call.1} parent=11 // pred_region
          _
        $region28: #{tpu_custom_call.1} parent=11 // pred_fallthru
          _
      $region12: #{tpu_custom_call.1} parent=5 // pred_fallthru
        _
      %p231 = scmp.lt.s32.totalorder %s22, 2
      // Predicated region
      $region29: #{tpu_custom_call.1} parent=5 // pred_check
        %p232 = pneg %p231
      $region30: #{tpu_custom_call.1} parent=5 // pred_check_branch
        %234 = sbr.rel (%p232) target = $region32
      $region31: #{tpu_custom_call.1} parent=5 // pred_region
        // Predicated region
        $region33: #{tpu_custom_call.1} parent=31 // pred_check
          %p235 = pneg %p42
        $region34: #{tpu_custom_call.1} parent=31 // pred_check_branch
          %237 = sbr.rel (%p235) target = $region36
        $region35: #{tpu_custom_call.1} parent=31 // pred_region
          %s238 = sand.u32 %s32, 1
          %s239 = scalar_lea.sflag [#allocation3], %s238
          %s240 = sand.u32 %s32, 1
          %s241 = smul.addr %s240, 8
          %s242 = scalar_lea.vmem [#allocation2], %s241
          %s244 = ssub.s32 128, 128
          %245 = vsyncadd %s239, %s244
          %s246 = smul.addr %s22, 2
          %s247 = smul.addr %s246, 64
          %s248 = scalar_lea.hbm %s0, %s247
          %s249 = sshll.u32 %s242, 4
          %s250 = int_to_ptr.vmem [resolvable:$true] %s249
          %255 = dma.hbm_to_vmem [thread:$0]  %s248, 128, %s250, %s239, 64, 64, 4
        $region36: #{tpu_custom_call.1} parent=31 // pred_fallthru
          _
        // Predicated region
        $region37: #{tpu_custom_call.1} parent=31 // pred_check
          %p256 = pneg %p68
        $region38: #{tpu_custom_call.1} parent=31 // pred_check_branch
          %258 = sbr.rel (%p256) target = $region40
        $region39: #{tpu_custom_call.1} parent=31 // pred_region
          %s259 = sand.u32 %s22, 1
          %s260 = scalar_lea.sflag [#allocation6], %s259
          %s261 = sand.u32 %s58, 1
          %s262 = smul.addr %s261, 16
          %s263 = scalar_lea.vmem [#allocation5], %s262
          %s265 = ssub.s32 256, 256
          %266 = vsyncadd %s260, %s265
          %s267 = smul.addr %s22, 2
          %s268 = smul.addr %s267, 128
          %s269 = scalar_lea.hbm %s1, %s268
          %s270 = sshll.u32 %s263, 4
          %s271 = int_to_ptr.vmem [resolvable:$true] %s270
          %276 = dma.hbm_to_vmem [thread:$0]  %s269, 256, %s271, %s260, 128, 128, 8
        $region40: #{tpu_custom_call.1} parent=31 // pred_fallthru
          _
      $region32: #{tpu_custom_call.1} parent=5 // pred_fallthru
        _
      %p277 = scmp.le.s32.totalorder 1, %s22
      %p278 = scmp.lt.s32.totalorder %s22, 3
      %p279 = pnand %p277, %p278
      %p280 = pneg %p279
      // Predicated region
      $region41: #{tpu_custom_call.1} parent=5 // pred_check
        _
      $region42: #{tpu_custom_call.1} parent=5 // pred_check_branch
        %282 = sbr.rel (%p279) target = $region44
      $region43: #{tpu_custom_call.1} parent=5 // pred_region
        %s283 = ssub.s32 %s22, 1
        %s284 = sand.u32 %s35, 1
        %s285 = scalar_lea.sflag [#allocation3], %s284
        %s286 = sand.u32 %s35, 1
        %s287 = smul.addr %s286, 8
        %s288 = scalar_lea.vmem [#allocation2], %s287
        // Predicated region
        $region45: #{tpu_custom_call.1} parent=43 // pred_check
          %p289 = pneg %p48
        $region46: #{tpu_custom_call.1} parent=43 // pred_check_branch
          %291 = sbr.rel (%p289) target = $region48
        $region47: #{tpu_custom_call.1} parent=43 // pred_region
          %292 = dma.done %s285, 128
        $region48: #{tpu_custom_call.1} parent=43 // pred_fallthru
          _
        %s293 = sand.u32 %s27, 1
        %s294 = scalar_lea.sflag [#allocation6], %s293
        %s295 = sand.u32 %s61, 1
        %s296 = smul.addr %s295, 16
        %s297 = scalar_lea.vmem [#allocation5], %s296
        // Predicated region
        $region49: #{tpu_custom_call.1} parent=43 // pred_check
          %p298 = pneg %p74
        $region50: #{tpu_custom_call.1} parent=43 // pred_check_branch
          %300 = sbr.rel (%p298) target = $region52
        $region51: #{tpu_custom_call.1} parent=43 // pred_region
          %301 = dma.done %s294, 256
        $region52: #{tpu_custom_call.1} parent=43 // pred_fallthru
          _
        // Predicated region
        $region53: #{tpu_custom_call.1} parent=43 // pred_check
          %p302 = pneg %p95
        $region54: #{tpu_custom_call.1} parent=43 // pred_check_branch
          %304 = sbr.rel (%p302) target = $region56
        $region55: #{tpu_custom_call.1} parent=43 // pred_region
          %305 = dma.done [#allocation6], 2048
        $region56: #{tpu_custom_call.1} parent=43 // pred_fallthru
          _
        // Predicated region
        $region57: #{tpu_custom_call.1} parent=43 // pred_check
          %p306 = pneg %p137
        $region58: #{tpu_custom_call.1} parent=43 // pred_check_branch
          %308 = sbr.rel (%p306) target = $region60
        $region59: #{tpu_custom_call.1} parent=43 // pred_region
          %309 = dma.done [#allocation9], 2048
        $region60: #{tpu_custom_call.1} parent=43 // pred_fallthru
          _
        %s310 = sand.u32 %s35, 1
        %s311 = scalar_lea.sflag [#allocation3], %s310
        %s312 = sand.u32 %s35, 1
        %s313 = smul.addr %s312, 8
        %s314 = scalar_lea.vmem [#allocation2], %s313
        %p315 = pneg %p48
        %p316 = pneg %p45
        %s317 = sand.u32 %s27, 1
        %s318 = scalar_lea.sflag [#allocation6], %s317
        %s319 = sand.u32 %s61, 1
        %s320 = smul.addr %s319, 16
        %s321 = scalar_lea.vmem [#allocation5], %s320
        %p322 = pneg %p74
        %p323 = pneg %p71
        %p324 = pneg %p95
        %p325 = pneg %p92
        %p326 = pneg %p116
        %p327 = pneg %p113
        %p328 = pneg %p137
        %p329 = pneg %p134
        %p330 = pneg %p158
        %p331 = pneg %p155
        %p332 = pneg %p184
        %p333 = pneg %p181
        %s334 = sand.u32 %s171, 1
        %s335 = scalar_lea.sflag [#allocation4], %s334
        %s336 = sand.u32 %s171, 1
        %s337 = smul.addr %s336, 8
        %s338 = scalar_lea.vmem [#allocation10], %s337
        %v340 = vld [vmem:[%s288] sm:$0xf]
        %v341 = vld [vmem:[%s288 + $0x4] sm:$0xf]
        %v342 = vld [vmem:[%s297] sm:$0xff]
        %v343 = vld [vmem:[%s297 + $0x8] sm:$0xff]
        %v344 = vld [vmem:[%s3] sm:$0x1]
        %v345 = vpack.c.bf16 %v343, %v342
        %v348 = vunpack.c.l.b16 %v340
        %v349 = vunpack.c.l.b16 %v341
        %v350 = vpack.c.b16 %v349, %v348
        %vm351 = vcmask 130048
        %v353 = vsel %vm351, %v350, 0
        %355 = vmatprep.subr.bf16.mxu0 0
        %356 = vmatpush1.bf16.msra.mxu0 %v345
        %357 = vmatprep.subr.bf16.mxu0 0
        %358 = vmatpush1.bf16.msra.mxu0 0
        %359 = vmatprep.subr.bf16.mxu0 0
        %360 = vmatpush1.bf16.msra.mxu0 0
        %361 = vmatprep.subr.bf16.mxu0 0
        %362 = vmatpush1.bf16.msra.mxu0 0
        %363 = vmatprep.subr.bf16.mxu0 0
        %364 = vmatpush1.bf16.msra.mxu0 0
        %365 = vmatprep.subr.bf16.mxu0 0
        %366 = vmatpush1.bf16.msra.mxu0 0
        %367 = vmatprep.subr.bf16.mxu0 0
        %368 = vmatpush1.bf16.msra.mxu0 0
        %369 = vmatprep.subr.bf16.mxu0 0
        %370 = vmatpush1.bf16.msra.mxu0 0
        %371 = vmatprep.subr.bf16.mxu0 0
        %372 = vmatpush1.bf16.msra.mxu0 0
        %373 = vmatprep.subr.bf16.mxu0 0
        %374 = vmatpush1.bf16.msra.mxu0 0
        %375 = vmatprep.subr.bf16.mxu0 0
        %376 = vmatpush1.bf16.msra.mxu0 0
        %377 = vmatprep.subr.bf16.mxu0 0
        %378 = vmatpush1.bf16.msra.mxu0 0
        %379 = vmatprep.subr.bf16.mxu0 0
        %380 = vmatpush1.bf16.msra.mxu0 0
        %381 = vmatprep.subr.bf16.mxu0 0
        %382 = vmatpush1.bf16.msra.mxu0 0
        %383 = vmatprep.subr.bf16.mxu0 0
        %384 = vmatpush1.bf16.msra.mxu0 0
        %385 = vmatprep.subr.bf16.mxu0 0
        %386 = vmatpush1.bf16.msra.mxu0 0
        %387 = vmatprep.mubr.bf16.mxu0 0
        %388 = vmatmul.mubr.bf16.gmra.mrb[0].mxu0 %v353
        %v389 = vpop.f32.mrb[0].mxu0
        %v390 = vadd.f32 0.0, %v389
        %v391 = vpop.f32.mrb[0].mxu0
        %v392 = vpop.f32.mrb[0].mxu0
        %v393 = vadd.f32 0.0, %v392
        %v394 = vpop.f32.mrb[0].mxu0
        %395 = vdwg.mxu0
        %v396 = vpack.c.bf16 %v393, %v390
        %v397 = vld [vmem:[#allocation7] sm:$0xf]
        %v398 = vld [vmem:[#allocation7 + $0x4] sm:$0xf]
        %v399 = vld [vmem:[#allocation7 + $0x8] sm:$0xf]
        %v400 = vld [vmem:[#allocation7 + $0xc] sm:$0xf]
        %v401 = vld [vmem:[#allocation7 + $0x10] sm:$0xf]
        %v402 = vld [vmem:[#allocation7 + $0x14] sm:$0xf]
        %v403 = vld [vmem:[#allocation7 + $0x18] sm:$0xf]
        %v404 = vld [vmem:[#allocation7 + $0x1c] sm:$0xf]
        %v405 = vld [vmem:[#allocation7 + $0x20] sm:$0xf]
        %v406 = vld [vmem:[#allocation7 + $0x24] sm:$0xf]
        %v407 = vld [vmem:[#allocation7 + $0x28] sm:$0xf]
        %v408 = vld [vmem:[#allocation7 + $0x2c] sm:$0xf]
        %v409 = vld [vmem:[#allocation7 + $0x30] sm:$0xf]
        %v410 = vld [vmem:[#allocation7 + $0x34] sm:$0xf]
        %v411 = vld [vmem:[#allocation7 + $0x38] sm:$0xf]
        %v412 = vld [vmem:[#allocation7 + $0x3c] sm:$0xf]
        %v413 = vld [vmem:[#allocation7 + $0x40] sm:$0xf]
        %v414 = vld [vmem:[#allocation7 + $0x44] sm:$0xf]
        %v415 = vld [vmem:[#allocation7 + $0x48] sm:$0xf]
        %v416 = vld [vmem:[#allocation7 + $0x4c] sm:$0xf]
        %v417 = vld [vmem:[#allocation7 + $0x50] sm:$0xf]
        %v418 = vld [vmem:[#allocation7 + $0x54] sm:$0xf]
        %v419 = vld [vmem:[#allocation7 + $0x58] sm:$0xf]
        %v420 = vld [vmem:[#allocation7 + $0x5c] sm:$0xf]
        %v421 = vld [vmem:[#allocation7 + $0x60] sm:$0xf]
        %v422 = vld [vmem:[#allocation7 + $0x64] sm:$0xf]
        %v423 = vld [vmem:[#allocation7 + $0x68] sm:$0xf]
        %v424 = vld [vmem:[#allocation7 + $0x6c] sm:$0xf]
        %v425 = vld [vmem:[#allocation7 + $0x70] sm:$0xf]
        %v426 = vld [vmem:[#allocation7 + $0x74] sm:$0xf]
        %v427 = vld [vmem:[#allocation7 + $0x78] sm:$0xf]
        %v428 = vld [vmem:[#allocation7 + $0x7c] sm:$0xf]
        %v430 = vlaneseq
        %v431 = vshrl.u32 %v430, 7
        %v432 = vsub.s32 0, %v431
        %v433 = vrot.slane %v344, %v432
        %v467 = vunpack.c.l.b16 %v397
        %v468 = vunpack.c.l.b16 %v398
        %v469 = vunpack.c.l.b16 %v399
        %v470 = vunpack.c.l.b16 %v400
        %v471 = vunpack.c.l.b16 %v401
        %v472 = vunpack.c.l.b16 %v402
        %v473 = vunpack.c.l.b16 %v403
        %v474 = vunpack.c.l.b16 %v404
        %v475 = vunpack.c.l.b16 %v405
        %v476 = vunpack.c.l.b16 %v406
        %v477 = vunpack.c.l.b16 %v407
        %v478 = vunpack.c.l.b16 %v408
        %v479 = vunpack.c.l.b16 %v409
        %v480 = vunpack.c.l.b16 %v410
        %v481 = vunpack.c.l.b16 %v411
        %v482 = vunpack.c.l.b16 %v412
        %v483 = vunpack.c.l.b16 %v413
        %v484 = vunpack.c.l.b16 %v414
        %v485 = vunpack.c.l.b16 %v415
        %v486 = vunpack.c.l.b16 %v416
        %v487 = vunpack.c.l.b16 %v417
        %v488 = vunpack.c.l.b16 %v418
        %v489 = vunpack.c.l.b16 %v419
        %v490 = vunpack.c.l.b16 %v420
        %v491 = vunpack.c.l.b16 %v421
        %v492 = vunpack.c.l.b16 %v422
        %v493 = vunpack.c.l.b16 %v423
        %v494 = vunpack.c.l.b16 %v424
        %v495 = vunpack.c.l.b16 %v425
        %v496 = vunpack.c.l.b16 %v426
        %v497 = vunpack.c.l.b16 %v427
        %v498 = vunpack.c.l.b16 %v428
        %v499 = vpack.c.b16 %v468, %v467
        %v500 = vpack.c.b16 %v470, %v469
        %v501 = vpack.c.b16 %v472, %v471
        %v502 = vpack.c.b16 %v474, %v473
        %v503 = vpack.c.b16 %v476, %v475
        %v504 = vpack.c.b16 %v478, %v477
        %v505 = vpack.c.b16 %v480, %v479
        %v506 = vpack.c.b16 %v482, %v481
        %v507 = vpack.c.b16 %v484, %v483
        %v508 = vpack.c.b16 %v486, %v485
        %v509 = vpack.c.b16 %v488, %v487
        %v510 = vpack.c.b16 %v490, %v489
        %v511 = vpack.c.b16 %v492, %v491
        %v512 = vpack.c.b16 %v494, %v493
        %v513 = vpack.c.b16 %v496, %v495
        %v514 = vpack.c.b16 %v498, %v497
        %531 = vmatprep.subr.bf16.mxu0 0
        %532 = vmatpush1.bf16.msra.mxu0 %v499
        %533 = vmatprep.subr.bf16.mxu0 0
        %534 = vmatpush1.bf16.msra.mxu0 %v500
        %535 = vmatprep.subr.bf16.mxu0 0
        %536 = vmatpush1.bf16.msra.mxu0 %v501
        %537 = vmatprep.subr.bf16.mxu0 0
        %538 = vmatpush1.bf16.msra.mxu0 %v502
        %539 = vmatprep.subr.bf16.mxu0 0
        %540 = vmatpush1.bf16.msra.mxu0 %v503
        %541 = vmatprep.subr.bf16.mxu0 0
        %542 = vmatpush1.bf16.msra.mxu0 %v504
        %543 = vmatprep.subr.bf16.mxu0 0
        %544 = vmatpush1.bf16.msra.mxu0 %v505
        %545 = vmatprep.subr.bf16.mxu0 0
        %546 = vmatpush1.bf16.msra.mxu0 %v506
        %547 = vmatprep.subr.bf16.mxu0 0
        %548 = vmatpush1.bf16.msra.mxu0 %v507
        %549 = vmatprep.subr.bf16.mxu0 0
        %550 = vmatpush1.bf16.msra.mxu0 %v508
        %551 = vmatprep.subr.bf16.mxu0 0
        %552 = vmatpush1.bf16.msra.mxu0 %v509
        %553 = vmatprep.subr.bf16.mxu0 0
        %554 = vmatpush1.bf16.msra.mxu0 %v510
        %555 = vmatprep.subr.bf16.mxu0 0
        %556 = vmatpush1.bf16.msra.mxu0 %v511
        %557 = vmatprep.subr.bf16.mxu0 0
        %558 = vmatpush1.bf16.msra.mxu0 %v512
        %559 = vmatprep.subr.bf16.mxu0 0
        %560 = vmatpush1.bf16.msra.mxu0 %v513
        %561 = vmatprep.subr.bf16.mxu0 0
        %562 = vmatpush1.bf16.msra.mxu0 %v514
        %563 = vmatprep.mubr.bf16.mxu0 %v345
        %564 = vmatmul.mubr.bf16.gmra.mrb[0].mxu0 %v396
        %v565 = vpop.f32.mrb[0].mxu0
        %v566 = vadd.f32 %v433, %v565
        %v567 = vpop.f32.mrb[0].mxu0
        %v568 = vpop.f32.mrb[0].mxu0
        %v569 = vadd.f32 %v433, %v568
        %v570 = vpop.f32.mrb[0].mxu0
        %571 = vdwg.mxu0
        %v572 = vmax.f32 %v566, 0.0
        %v573 = vmax.f32 %v569, 0.0
        %v574 = vld [vmem:[%s5] sm:$0x1]
        %v575 = vpack.c.bf16 %v573, %v572
        %576 = vmatprep.subr.bf16.mxu0 0
        %577 = vmatpush1.bf16.msra.mxu0 %v575
        %578 = vmatprep.subr.bf16.mxu0 0
        %579 = vmatpush1.bf16.msra.mxu0 0
        %580 = vmatprep.subr.bf16.mxu0 0
        %581 = vmatpush1.bf16.msra.mxu0 0
        %582 = vmatprep.subr.bf16.mxu0 0
        %583 = vmatpush1.bf16.msra.mxu0 0
        %584 = vmatprep.subr.bf16.mxu0 0
        %585 = vmatpush1.bf16.msra.mxu0 0
        %586 = vmatprep.subr.bf16.mxu0 0
        %587 = vmatpush1.bf16.msra.mxu0 0
        %588 = vmatprep.subr.bf16.mxu0 0
        %589 = vmatpush1.bf16.msra.mxu0 0
        %590 = vmatprep.subr.bf16.mxu0 0
        %591 = vmatpush1.bf16.msra.mxu0 0
        %592 = vmatprep.subr.bf16.mxu0 0
        %593 = vmatpush1.bf16.msra.mxu0 0
        %594 = vmatprep.subr.bf16.mxu0 0
        %595 = vmatpush1.bf16.msra.mxu0 0
        %596 = vmatprep.subr.bf16.mxu0 0
        %597 = vmatpush1.bf16.msra.mxu0 0
        %598 = vmatprep.subr.bf16.mxu0 0
        %599 = vmatpush1.bf16.msra.mxu0 0
        %600 = vmatprep.subr.bf16.mxu0 0
        %601 = vmatpush1.bf16.msra.mxu0 0
        %602 = vmatprep.subr.bf16.mxu0 0
        %603 = vmatpush1.bf16.msra.mxu0 0
        %604 = vmatprep.subr.bf16.mxu0 0
        %605 = vmatpush1.bf16.msra.mxu0 0
        %606 = vmatprep.subr.bf16.mxu0 0
        %607 = vmatpush1.bf16.msra.mxu0 0
        %608 = vmatprep.mubr.bf16.mxu0 0
        %609 = vmatmul.mubr.bf16.gmra.mrb[0].mxu0 %v353
        %v610 = vpop.f32.mrb[0].mxu0
        %v611 = vadd.f32 0.0, %v610
        %v612 = vpop.f32.mrb[0].mxu0
        %v613 = vpop.f32.mrb[0].mxu0
        %v614 = vadd.f32 0.0, %v613
        %v615 = vpop.f32.mrb[0].mxu0
        %616 = vdwg.mxu0
        %v617 = vpack.c.bf16 %v614, %v611
        %v618 = vld [vmem:[#allocation8] sm:$0xf]
        %v619 = vld [vmem:[#allocation8 + $0x4] sm:$0xf]
        %v620 = vld [vmem:[#allocation8 + $0x8] sm:$0xf]
        %v621 = vld [vmem:[#allocation8 + $0xc] sm:$0xf]
        %v622 = vld [vmem:[#allocation8 + $0x10] sm:$0xf]
        %v623 = vld [vmem:[#allocation8 + $0x14] sm:$0xf]
        %v624 = vld [vmem:[#allocation8 + $0x18] sm:$0xf]
        %v625 = vld [vmem:[#allocation8 + $0x1c] sm:$0xf]
        %v626 = vld [vmem:[#allocation8 + $0x20] sm:$0xf]
        %v627 = vld [vmem:[#allocation8 + $0x24] sm:$0xf]
        %v628 = vld [vmem:[#allocation8 + $0x28] sm:$0xf]
        %v629 = vld [vmem:[#allocation8 + $0x2c] sm:$0xf]
        %v630 = vld [vmem:[#allocation8 + $0x30] sm:$0xf]
        %v631 = vld [vmem:[#allocation8 + $0x34] sm:$0xf]
        %v632 = vld [vmem:[#allocation8 + $0x38] sm:$0xf]
        %v633 = vld [vmem:[#allocation8 + $0x3c] sm:$0xf]
        %v634 = vld [vmem:[#allocation8 + $0x40] sm:$0xf]
        %v635 = vld [vmem:[#allocation8 + $0x44] sm:$0xf]
        %v636 = vld [vmem:[#allocation8 + $0x48] sm:$0xf]
        %v637 = vld [vmem:[#allocation8 + $0x4c] sm:$0xf]
        %v638 = vld [vmem:[#allocation8 + $0x50] sm:$0xf]
        %v639 = vld [vmem:[#allocation8 + $0x54] sm:$0xf]
        %v640 = vld [vmem:[#allocation8 + $0x58] sm:$0xf]
        %v641 = vld [vmem:[#allocation8 + $0x5c] sm:$0xf]
        %v642 = vld [vmem:[#allocation8 + $0x60] sm:$0xf]
        %v643 = vld [vmem:[#allocation8 + $0x64] sm:$0xf]
        %v644 = vld [vmem:[#allocation8 + $0x68] sm:$0xf]
        %v645 = vld [vmem:[#allocation8 + $0x6c] sm:$0xf]
        %v646 = vld [vmem:[#allocation8 + $0x70] sm:$0xf]
        %v647 = vld [vmem:[#allocation8 + $0x74] sm:$0xf]
        %v648 = vld [vmem:[#allocation8 + $0x78] sm:$0xf]
        %v649 = vld [vmem:[#allocation8 + $0x7c] sm:$0xf]
        %v651 = vlaneseq
        %v652 = vshrl.u32 %v651, 7
        %v653 = vsub.s32 0, %v652
        %v654 = vrot.slane %v574, %v653
        %v688 = vunpack.c.l.b16 %v618
        %v689 = vunpack.c.l.b16 %v619
        %v690 = vunpack.c.l.b16 %v620
        %v691 = vunpack.c.l.b16 %v621
        %v692 = vunpack.c.l.b16 %v622
        %v693 = vunpack.c.l.b16 %v623
        %v694 = vunpack.c.l.b16 %v624
        %v695 = vunpack.c.l.b16 %v625
        %v696 = vunpack.c.l.b16 %v626
        %v697 = vunpack.c.l.b16 %v627
        %v698 = vunpack.c.l.b16 %v628
        %v699 = vunpack.c.l.b16 %v629
        %v700 = vunpack.c.l.b16 %v630
        %v701 = vunpack.c.l.b16 %v631
        %v702 = vunpack.c.l.b16 %v632
        %v703 = vunpack.c.l.b16 %v633
        %v704 = vunpack.c.l.b16 %v634
        %v705 = vunpack.c.l.b16 %v635
        %v706 = vunpack.c.l.b16 %v636
        %v707 = vunpack.c.l.b16 %v637
        %v708 = vunpack.c.l.b16 %v638
        %v709 = vunpack.c.l.b16 %v639
        %v710 = vunpack.c.l.b16 %v640
        %v711 = vunpack.c.l.b16 %v641
        %v712 = vunpack.c.l.b16 %v642
        %v713 = vunpack.c.l.b16 %v643
        %v714 = vunpack.c.l.b16 %v644
        %v715 = vunpack.c.l.b16 %v645
        %v716 = vunpack.c.l.b16 %v646
        %v717 = vunpack.c.l.b16 %v647
        %v718 = vunpack.c.l.b16 %v648
        %v719 = vunpack.c.l.b16 %v649
        %v720 = vpack.c.b16 %v689, %v688
        %v721 = vpack.c.b16 %v691, %v690
        %v722 = vpack.c.b16 %v693, %v692
        %v723 = vpack.c.b16 %v695, %v694
        %v724 = vpack.c.b16 %v697, %v696
        %v725 = vpack.c.b16 %v699, %v698
        %v726 = vpack.c.b16 %v701, %v700
        %v727 = vpack.c.b16 %v703, %v702
        %v728 = vpack.c.b16 %v705, %v704
        %v729 = vpack.c.b16 %v707, %v706
        %v730 = vpack.c.b16 %v709, %v708
        %v731 = vpack.c.b16 %v711, %v710
        %v732 = vpack.c.b16 %v713, %v712
        %v733 = vpack.c.b16 %v715, %v714
        %v734 = vpack.c.b16 %v717, %v716
        %v735 = vpack.c.b16 %v719, %v718
        %752 = vmatprep.subr.bf16.mxu0 0
        %753 = vmatpush1.bf16.msra.mxu0 %v720
        %754 = vmatprep.subr.bf16.mxu0 0
        %755 = vmatpush1.bf16.msra.mxu0 %v721
        %756 = vmatprep.subr.bf16.mxu0 0
        %757 = vmatpush1.bf16.msra.mxu0 %v722
        %758 = vmatprep.subr.bf16.mxu0 0
        %759 = vmatpush1.bf16.msra.mxu0 %v723
        %760 = vmatprep.subr.bf16.mxu0 0
        %761 = vmatpush1.bf16.msra.mxu0 %v724
        %762 = vmatprep.subr.bf16.mxu0 0
        %763 = vmatpush1.bf16.msra.mxu0 %v725
        %764 = vmatprep.subr.bf16.mxu0 0
        %765 = vmatpush1.bf16.msra.mxu0 %v726
        %766 = vmatprep.subr.bf16.mxu0 0
        %767 = vmatpush1.bf16.msra.mxu0 %v727
        %768 = vmatprep.subr.bf16.mxu0 0
        %769 = vmatpush1.bf16.msra.mxu0 %v728
        %770 = vmatprep.subr.bf16.mxu0 0
        %771 = vmatpush1.bf16.msra.mxu0 %v729
        %772 = vmatprep.subr.bf16.mxu0 0
        %773 = vmatpush1.bf16.msra.mxu0 %v730
        %774 = vmatprep.subr.bf16.mxu0 0
        %775 = vmatpush1.bf16.msra.mxu0 %v731
        %776 = vmatprep.subr.bf16.mxu0 0
        %777 = vmatpush1.bf16.msra.mxu0 %v732
        %778 = vmatprep.subr.bf16.mxu0 0
        %779 = vmatpush1.bf16.msra.mxu0 %v733
        %780 = vmatprep.subr.bf16.mxu0 0
        %781 = vmatpush1.bf16.msra.mxu0 %v734
        %782 = vmatprep.subr.bf16.mxu0 0
        %783 = vmatpush1.bf16.msra.mxu0 %v735
        %784 = vmatprep.mubr.bf16.mxu0 %v575
        %785 = vmatmul.mubr.bf16.gmra.mrb[0].mxu0 %v617
        %v786 = vpop.f32.mrb[0].mxu0
        %v787 = vadd.f32 %v654, %v786
        %v788 = vpop.f32.mrb[0].mxu0
        %v789 = vpop.f32.mrb[0].mxu0
        %v790 = vadd.f32 %v654, %v789
        %v791 = vpop.f32.mrb[0].mxu0
        %792 = vdwg.mxu0
        %v793 = vpack.c.bf16 %v790, %v787
        %v795 = vunpack.c.l.b16 %v793
        %v796 = vunpack.c.h.b16 %v793
        %v797 = vpack.c.b16 %v795, %v795
        %v798 = vpack.c.b16 %v796, %v796
        %801 = vst [vmem:[%s338] sm:$0xf] %v797
        %802 = vst [vmem:[%s338 + $0x4] sm:$0xf] %v798
        %s803 = sand.u32 %s171, 1
        %s804 = scalar_lea.sflag [#allocation4], %s803
        %s805 = sand.u32 %s171, 1
        %s806 = smul.addr %s805, 8
        %s807 = scalar_lea.vmem [#allocation10], %s806
        // Predicated region
        $region61: #{tpu_custom_call.1} parent=43 // pred_check
          %p808 = pneg %p181
        $region62: #{tpu_custom_call.1} parent=43 // pred_check_branch
          %810 = sbr.rel (%p808) target = $region64
        $region63: #{tpu_custom_call.1} parent=43 // pred_region
          %s812 = ssub.s32 128, 128
          %813 = vsyncadd %s804, %s812
          %s814 = smul.addr %s27, 2
          %s815 = smul.addr %s814, 64
          %s816 = scalar_lea.hbm %s6, %s815
          %s817 = sshll.u32 %s807, 4
          %s818 = int_to_ptr.vmem [resolvable:$true] %s817
          %823 = dma.vmem_to_hbm [thread:$0]  %s818, 128, %s816, %s804, 64, 64, 4
        $region64: #{tpu_custom_call.1} parent=43 // pred_fallthru
          _
      $region44: #{tpu_custom_call.1} parent=5 // pred_fallthru
        _
      %p824 = scmp.le.s32.totalorder 2, %s22
      // Predicated region
      $region65: #{tpu_custom_call.1} parent=5 // pred_check
        %p825 = pneg %p824
      $region66: #{tpu_custom_call.1} parent=5 // pred_check_branch
        %827 = sbr.rel (%p825) target = $region68
      $region67: #{tpu_custom_call.1} parent=5 // pred_region
        %s828 = ssub.s32 %s22, 2
        // Predicated region
        $region69: #{tpu_custom_call.1} parent=67 // pred_check
          %p829 = pneg %p187
        $region70: #{tpu_custom_call.1} parent=67 // pred_check_branch
          %831 = sbr.rel (%p829) target = $region72
        $region71: #{tpu_custom_call.1} parent=67 // pred_region
          %s832 = sand.u32 %s172, 1
          %s833 = scalar_lea.sflag [#allocation4], %s832
          %s834 = sand.u32 %s172, 1
          %s835 = smul.addr %s834, 8
          %s836 = scalar_lea.vmem [#allocation10], %s835
          %837 = dma.done %s833, 128
        $region72: #{tpu_custom_call.1} parent=67 // pred_fallthru
          _
      $region68: #{tpu_custom_call.1} parent=5 // pred_fallthru
        _
    $region6: #{tpu_custom_call.1} parent=1 // loop_footer
      %s26 = sadd.s32 1, %s22
    $region7: #{tpu_custom_call.1} parent=1 // loop_footer_branch
      %21 = sbr.rel target = $region3
    $region8: #{tpu_custom_call.1} parent=1 // loop_exit
      _
    %838 = vsyncpa [#allocation3], 1
    %s839 = scalar_lea.sflag [#allocation3], 1
    %840 = vsyncpa %s839, 1
    %841 = vsyncpa [#allocation6], 1
    %s842 = scalar_lea.sflag [#allocation6], 1
    %843 = vsyncpa %s842, 1
    %844 = vsyncpa [#allocation9], 1
    %845 = vsyncpa [#allocation4], 1
    %s846 = scalar_lea.sflag [#allocation4], 1
    %847 = vsyncpa %s846, 1

</llo_original>
